<compile_context>
chip_gen: v6e
topology: v6e:2x2x1
jax: 0.10.0
libtpu: 0.0.40
codegen_flags: <defaults>
</compile_context>

<pallas_src>
import math

import jax
import jax.numpy as jnp
from jax.experimental import pallas as pl
from jax.experimental.pallas import tpu as pltpu


# ---------------------------------------------------------------------------
# Kernel
# ---------------------------------------------------------------------------
def _gcn_res_block_kernel(x_ref, mask_ref, diff_ref, k_ref, bt_ref, w_ref, bcol_ref,
                          res_ref, skip_ref):
    TB, C, JL = x_ref.shape

    # ---- time graph conv on the whole (TB*C, JL) slab (kron-fused, BN folded) ----
    # flatten while still f32 (layout-free: each (C, JL)=(8,128) is one f32 tile),
    # then cast operands to bf16; accumulate in f32 on the MXU.
    y = (x_ref[...] + diff_ref[...]).reshape(TB * C, JL).astype(jnp.bfloat16)
    h = jnp.dot(y, k_ref[0], preferred_element_type=jnp.float32) + bt_ref[...]
    h = jnp.maximum(h, 0.0)                                              # (TB*C, JL) f32

    # ---- feature-branch adjacency aggregation, still on the full slab ----
    agg = jnp.dot(h.astype(jnp.bfloat16), k_ref[1], preferred_element_type=jnp.float32)

    inv_sqrt2 = 1.0 / math.sqrt(2.0)

    # ---- per-batch-element small (K=C) matmul chain: Wf_fold, Wm (+cond), Wo ----
    # kept 2-D and transpose-free; weights / bias columns are read as ref slices.
    for b in range(TB):
        agg_b = agg[b * C:(b + 1) * C]                                   # (C, JL) sublane slice

        g = (jnp.dot(w_ref[0:C, :], agg_b, preferred_element_type=jnp.float32)
             + bcol_ref[0:C, 0:1])
        g = jnp.maximum(g, 0.0)                                          # (C, JL)

        mid = (jnp.dot(w_ref[C:3 * C, :], g, preferred_element_type=jnp.float32)
               + bcol_ref[:, 1:2] + bcol_ref[:, 2:3] * mask_ref[b])      # (2C, JL)
        z = jax.nn.sigmoid(mid[:C]) * jnp.tanh(mid[C:])                  # (C, JL)

        out2 = (jnp.dot(w_ref[3 * C:5 * C, :], z, preferred_element_type=jnp.float32)
                + bcol_ref[:, 3:4])                                      # (2C, JL)

        # re-read x from VMEM here (one vld) instead of holding it across the kernel
        res_ref[b] = (x_ref[b] + out2[:C]) * inv_sqrt2
        skip_ref[b] = out2[C:]


# ---------------------------------------------------------------------------
# Wrapper
# ---------------------------------------------------------------------------
def _pick_tb(batch, max_tb=8):
    """Batch-tile size: keep >= 2 grid steps when B >= 2 (v7x: feed both TensorCores),
    cap TB for vreg pressure, and require TB | B (no ragged last block)."""
    tb = min(max_tb, batch)
    if batch >= 2:
        tb = min(tb, batch // 2)
    tb = max(tb, 1)
    while batch % tb:
        tb -= 1
    return tb


def gcn_residual_block(x, cond_info, diffusion_emb, packed, max_tb=8):
    """x: (B, C, J, L), cond_info: (B, Cc, J, L), diffusion_emb: (B, E).
    Returns ((x + residual)/sqrt(2), skip), each (B, C, J, L)."""
    kslab, bias_t, w_small, bias_cols, wd, bd = packed
    B, C, J, L = x.shape
    JL = J * L
    assert JL % 128 == 0, "kernel assumes lane-dense slabs: J*L must be a multiple of 128"
    assert C % 8 == 0, "kernel assumes sublane-aligned channel splits: C must be a multiple of 8"

    TB = _pick_tb(B, max_tb)

    x_flat = x.reshape(B, C, JL).astype(jnp.float32)
    # cond_projection consumes only the last cond channel (mask), as in the reference forward
    mask = cond_info[:, -1, :, :].reshape(B, 1, JL).astype(jnp.float32)
    # diffusion projection hoisted out of the kernel (1-row matmul is an MXU bubble)
    diff = (diffusion_emb.astype(jnp.float32) @ wd.T + bd).reshape(B, C, 1)

    res_flat, skip_flat = pl.pallas_call(
        _gcn_res_block_kernel,
        grid=(B // TB,),
        in_specs=[
            pl.BlockSpec((TB, C, JL), lambda b: (b, 0, 0)),      # x
            pl.BlockSpec((TB, 1, JL), lambda b: (b, 0, 0)),      # mask
            pl.BlockSpec((TB, C, 1), lambda b: (b, 0, 0)),       # diffusion bias
            pl.BlockSpec((2, JL, JL), lambda b: (0, 0, 0)),      # [Kt_folded, Ka] (bf16)
            pl.BlockSpec((1, JL), lambda b: (0, 0)),             # time-branch bias row
            pl.BlockSpec((5 * C, C), lambda b: (0, 0)),          # [Wf_fold; Wm; Wo]
            pl.BlockSpec((2 * C, 4), lambda b: (0, 0)),          # column-bias pack
        ],
        out_specs=(
            pl.BlockSpec((TB, C, JL), lambda b: (b, 0, 0)),
            pl.BlockSpec((TB, C, JL), lambda b: (b, 0, 0)),
        ),
        out_shape=(
            jax.ShapeDtypeStruct((B, C, JL), jnp.float32),
            jax.ShapeDtypeStruct((B, C, JL), jnp.float32),
        ),
        compiler_params=pltpu.CompilerParams(dimension_semantics=("parallel",)),
    )(x_flat, mask, diff, kslab, bias_t, w_small, bias_cols)

    return res_flat.reshape(B, C, J, L), skip_flat.reshape(B, C, J, L)


# ---------------------------------------------------------------------------
# Parameter preparation (fold BN / cond bias, fuse graph convs into kron mats)
# ---------------------------------------------------------------------------
def pack_params(raw, channels, seq_len, num_joints, eps=1e-5):
    C, L, J = channels, seq_len, num_joints
    adj = raw["adj"]

    st = raw["bn_t_gamma"] / jnp.sqrt(raw["bn_t_var"] + eps)
    tt = raw["bn_t_beta"] - raw["bn_t_mean"] * st
    sf = raw["bn_f_gamma"] / jnp.sqrt(raw["bn_f_var"] + eps)
    tf = raw["bn_f_beta"] - raw["bn_f_mean"] * sf

    # time layer as a single (J*L, J*L) right-matmul: kron(adj^T, Wt^T), BN scale on columns
    kt = jnp.kron(adj.T, raw["wt"].T) * jnp.tile(st, J)[None, :]
    # feature-layer adjacency aggregation: kron(adj^T, I_L)
    ka = jnp.kron(adj.T, jnp.eye(L, dtype=jnp.float32))
    # bf16 K-slab (review #3): bf16 MXU operands, f32 accumulation in-kernel
    kslab = jnp.stack([kt, ka]).astype(jnp.bfloat16)                 # (2, J*L, J*L)

    bias_t = jnp.tile(raw["bt"] * st + tt, J).reshape(1, J * L).astype(jnp.float32)

    wf_fold = raw["wf"] * sf[:, None]                                # BN folded into Wf
    w_small = jnp.concatenate([wf_fold, raw["wm"], raw["wo"]], axis=0).astype(jnp.float32)

    bias_f = raw["bf"] * sf + tf                                     # (C,)
    bias_cols = jnp.stack([
        jnp.concatenate([bias_f, jnp.zeros((C,), jnp.float32)]),     # (2C,) padded
        raw["bm"] + raw["bc"],                                       # cond bias folded in
        raw["wc"][:, 0],
        raw["bo"],
    ], axis=1).astype(jnp.float32)                                   # (2C, 4)

    return (kslab, bias_t, w_small, bias_cols,
            raw["wd"].astype(jnp.float32), raw["bd"].astype(jnp.float32))


def init_raw_params(key, channels, seq_len, num_joints, diffusion_embedding_dim):
    """Deterministic synthetic parameters matching the module's __init__ shapes
    (PyTorch conventions: Linear/Conv weights are (out, in))."""
    C, L, J, E = channels, seq_len, num_joints, diffusion_embedding_dim
    ks = jax.random.split(key, 17)

    def kaiming(k, shape, fan_in):
        return jax.random.normal(k, shape, jnp.float32) * jnp.sqrt(2.0 / fan_in)

    # normalized adjacency: chain graph over joints + self loops, symmetric normalization
    adj = jnp.zeros((J, J), jnp.float32)
    idx = jnp.arange(J - 1)
    adj = adj.at[idx, idx + 1].set(1.0).at[idx + 1, idx].set(1.0)
    adj = adj + jnp.eye(J, dtype=jnp.float32)
    dinv = 1.0 / jnp.sqrt(jnp.sum(adj, axis=-1))
    adj = adj * dinv[:, None] * dinv[None, :]

    raw = dict(
        adj=adj,
        wt=kaiming(ks[0], (L, L), L),
        bt=0.02 * jax.random.normal(ks[1], (L,)),
        bn_t_gamma=1.0 + 0.1 * jax.random.normal(ks[2], (L,)),
        bn_t_beta=0.1 * jax.random.normal(ks[3], (L,)),
        bn_t_mean=0.1 * jax.random.normal(ks[4], (L,)),
        bn_t_var=1.0 + 0.1 * jax.random.uniform(ks[5], (L,)),
        wf=kaiming(ks[6], (C, C), C),
        bf=0.02 * jax.random.normal(ks[7], (C,)),
        bn_f_gamma=1.0 + 0.1 * jax.random.normal(ks[8], (C,)),
        bn_f_beta=0.1 * jax.random.normal(ks[9], (C,)),
        bn_f_mean=0.1 * jax.random.normal(ks[10], (C,)),
        bn_f_var=1.0 + 0.1 * jax.random.uniform(ks[11], (C,)),
        wd=jax.random.normal(ks[12], (C, E)) / math.sqrt(E),
        bd=0.02 * jax.random.normal(ks[13], (C,)),
        wm=kaiming(ks[14], (2 * C, C), C), bm=jnp.zeros((2 * C,)),
        wc=kaiming(ks[15], (2 * C, 1), 1), bc=jnp.zeros((2 * C,)),
        wo=kaiming(ks[16], (2 * C, C), C), bo=jnp.zeros((2 * C,)),
    )
    return {k: v.astype(jnp.float32) for k, v in raw.items()}


# ---------------------------------------------------------------------------
# Pure-JAX reference (same assumed 'dc_preagg' semantics), for verification
# ---------------------------------------------------------------------------
def reference_forward(x, cond_info, diffusion_emb, raw, eps=1e-5):
    B, C, J, L = x.shape
    hp = jax.lax.Precision.HIGHEST
    diff = diffusion_emb @ raw["wd"].T + raw["bd"]
    y = x + diff[:, :, None, None]

    st = raw["bn_t_gamma"] / jnp.sqrt(raw["bn_t_var"] + eps)
    tt = raw["bn_t_beta"] - raw["bn_t_mean"] * st
    agg = jnp.einsum("ij,bcjl->bcil", raw["adj"], y, precision=hp)
    lin = jnp.einsum("bcil,ml->bcim", agg, raw["wt"], precision=hp) + raw["bt"]
    h = jax.nn.relu(lin * st + tt)

    sf = raw["bn_f_gamma"] / jnp.sqrt(raw["bn_f_var"] + eps)
    tf = raw["bn_f_beta"] - raw["bn_f_mean"] * sf
    aggf = jnp.einsum("ij,bcjl->bcil", raw["adj"], h, precision=hp)
    linf = jnp.einsum("bcil,kc->bkil", aggf, raw["wf"], precision=hp) + raw["bf"][None, :, None, None]
    g = jax.nn.relu(linf * sf[None, :, None, None] + tf[None, :, None, None])

    g2 = g.reshape(B, C, J * L)
    mid = jnp.einsum("oc,bcp->bop", raw["wm"], g2, precision=hp) + raw["bm"][None, :, None]
    mask = cond_info[:, -1].reshape(B, 1, J * L)
    mid = mid + raw["wc"][None, :, :] * mask + raw["bc"][None, :, None]
    z = jax.nn.sigmoid(mid[:, :C]) * jnp.tanh(mid[:, C:])
    out2 = jnp.einsum("oc,bcp->bop", raw["wo"], z, precision=hp) + raw["bo"][None, :, None]
    residual = out2[:, :C].reshape(B, C, J, L)
    skip = out2[:, C:].reshape(B, C, J, L)
    return (x + residual) / math.sqrt(2.0), skip


if __name__ == "__main__":
    # Small shapes consistent with the module: channels=8, J=16 joints, seq_len L=8 (J*L=128),
    # diffusion_embedding_dim=32, input_channels=1 (the mask channel used by cond_projection).
    B, C, J, L, E = 2, 8, 16, 8, 32
    key = jax.random.PRNGKey(0)
    k1, k2, k3, k4 = jax.random.split(key, 4)

    x = jax.random.normal(k1, (B, C, J, L), jnp.float32)
    cond_info = jax.random.normal(k2, (B, 2, J, L), jnp.float32)
    # the last cond channel plays the role of the observation mask
    cond_info = cond_info.at[:, -1].set((cond_info[:, -1] > 0).astype(jnp.float32))
    diffusion_emb = jax.random.normal(k3, (B, E), jnp.float32)

    raw = init_raw_params(k4, channels=C, seq_len=L, num_joints=J, diffusion_embedding_dim=E)
    packed = pack_params(raw, channels=C, seq_len=L, num_joints=J)

    res, skip = jax.jit(gcn_residual_block)(x, cond_info, diffusion_emb, packed)
    jax.block_until_ready((res, skip))

    res_ref, skip_ref = reference_forward(x, cond_info, diffusion_emb, raw)
    assert res.shape == (B, C, J, L) and skip.shape == (B, C, J, L)
    assert bool(jnp.all(jnp.isfinite(res))) and bool(jnp.all(jnp.isfinite(skip)))
    # bf16 kron-matmul operands (8-bit mantissa, K=128 contraction, f32 accumulation) vs the
    # f32 HIGHEST-precision reference -> tolerance loosened from 2e-3 to 2e-2.
    assert bool(jnp.allclose(res, res_ref, rtol=2e-2, atol=2e-2))
    assert bool(jnp.allclose(skip, skip_ref, rtol=2e-2, atol=2e-2))
    print("KERNEL_OK")
</pallas_src>

<mosaic_0001>
module attributes {stable_mosaic.version = 11 : i64} {
  func.func @_gcn_res_block_kernel(%arg0: i32, %arg1: memref<1x8x128xf32, #tpu.memory_space<vmem>>, %arg2: memref<1x1x128xf32, #tpu.memory_space<vmem>>, %arg3: memref<1x8x1xf32, #tpu.memory_space<vmem>>, %arg4: memref<2x128x128xbf16, #tpu.memory_space<vmem>>, %arg5: memref<1x128xf32, #tpu.memory_space<vmem>>, %arg6: memref<40x8xf32, #tpu.memory_space<vmem>>, %arg7: memref<16x4xf32, #tpu.memory_space<vmem>>, %arg8: memref<1x8x128xf32, #tpu.memory_space<vmem>>, %arg9: memref<1x8x128xf32, #tpu.memory_space<vmem>>) attributes {dimension_semantics = [#tpu.dimension_semantics<parallel>], iteration_bounds = array<i64: 2>, scalar_prefetch = 0 : i64, scratch_operands = 0 : i64, tpu.core_type = #tpu.core_type<tc>, window_params = [{transform_indices = @transform_0, window_bounds = array<i64: 1, 8, 128>}, {transform_indices = @transform_1, window_bounds = array<i64: 1, 1, 128>}, {transform_indices = @transform_2, window_bounds = array<i64: 1, 8, 1>}, {pipeline_mode = #tpu.pipeline_mode<synchronous>, transform_indices = @transform_3, window_bounds = array<i64: 2, 128, 128>}, {pipeline_mode = #tpu.pipeline_mode<synchronous>, transform_indices = @transform_4, window_bounds = array<i64: 1, 128>}, {pipeline_mode = #tpu.pipeline_mode<synchronous>, transform_indices = @transform_5, window_bounds = array<i64: 40, 8>}, {pipeline_mode = #tpu.pipeline_mode<synchronous>, transform_indices = @transform_6, window_bounds = array<i64: 16, 4>}, {transform_indices = @transform_7, window_bounds = array<i64: 1, 8, 128>}, {transform_indices = @transform_8, window_bounds = array<i64: 1, 8, 128>}]} {
    %c0 = arith.constant 0 : index
    %c0_0 = arith.constant 0 : index
    %c0_1 = arith.constant 0 : index
    %0 = vector.load %arg1[%c0, %c0_0, %c0_1] : memref<1x8x128xf32, #tpu.memory_space<vmem>>, vector<1x8x128xf32>
    %c0_2 = arith.constant 0 : index
    %c0_3 = arith.constant 0 : index
    %c0_4 = arith.constant 0 : index
    %1 = vector.load %arg3[%c0_2, %c0_3, %c0_4] : memref<1x8x1xf32, #tpu.memory_space<vmem>>, vector<1x8x1xf32>
    %2 = vector.broadcast %1 : vector<1x8x1xf32> to vector<1x8x128xf32>
    %3 = arith.addf %0, %2 : vector<1x8x128xf32>
    %4 = vector.shape_cast %3 : vector<1x8x128xf32> to vector<8x128xf32>
    %5 = arith.truncf %4 : vector<8x128xf32> to vector<8x128xbf16>
    %c0_5 = arith.constant 0 : index
    %c0_6 = arith.constant 0 : index
    %c0_7 = arith.constant 0 : index
    %6 = vector.load %arg4[%c0_5, %c0_6, %c0_7] : memref<2x128x128xbf16, #tpu.memory_space<vmem>>, vector<1x128x128xbf16>
    %7 = vector.shape_cast %6 : vector<1x128x128xbf16> to vector<128x128xbf16>
    %cst = arith.constant dense<0.000000e+00> : vector<8x128xf32>
    %8 = tpu.matmul %5, %7, %cst {dimension_numbers = #tpu.dot_dimension_numbers<[1], [0], [0], [1], [0, 0, 1, 1], [], []>} : vector<8x128xbf16>, vector<128x128xbf16>, vector<8x128xf32> -> vector<8x128xf32>
    %c0_8 = arith.constant 0 : index
    %c0_9 = arith.constant 0 : index
    %9 = vector.load %arg5[%c0_8, %c0_9] : memref<1x128xf32, #tpu.memory_space<vmem>>, vector<1x128xf32>
    %10 = vector.broadcast %9 : vector<1x128xf32> to vector<8x128xf32>
    %11 = arith.addf %8, %10 : vector<8x128xf32>
    %cst_10 = arith.constant 0.000000e+00 : f32
    %12 = vector.broadcast %cst_10 : f32 to vector<8x128xf32>
    %13 = arith.maximumf %11, %12 : vector<8x128xf32>
    %14 = arith.truncf %13 : vector<8x128xf32> to vector<8x128xbf16>
    %c1 = arith.constant 1 : index
    %c0_11 = arith.constant 0 : index
    %c0_12 = arith.constant 0 : index
    %15 = vector.load %arg4[%c1, %c0_11, %c0_12] : memref<2x128x128xbf16, #tpu.memory_space<vmem>>, vector<1x128x128xbf16>
    %16 = vector.shape_cast %15 : vector<1x128x128xbf16> to vector<128x128xbf16>
    %cst_13 = arith.constant dense<0.000000e+00> : vector<8x128xf32>
    %17 = tpu.matmul %14, %16, %cst_13 {dimension_numbers = #tpu.dot_dimension_numbers<[1], [0], [0], [1], [0, 0, 1, 1], [], []>} : vector<8x128xbf16>, vector<128x128xbf16>, vector<8x128xf32> -> vector<8x128xf32>
    %c0_14 = arith.constant 0 : index
    %c0_15 = arith.constant 0 : index
    %18 = vector.load %arg6[%c0_14, %c0_15] : memref<40x8xf32, #tpu.memory_space<vmem>>, vector<8x8xf32>
    %cst_16 = arith.constant dense<0.000000e+00> : vector<8x128xf32>
    %19 = tpu.matmul %18, %17, %cst_16 {dimension_numbers = #tpu.dot_dimension_numbers<[1], [0], [0], [1], [0, 0, 1, 1], [], []>} : vector<8x8xf32>, vector<8x128xf32>, vector<8x128xf32> -> vector<8x128xf32>
    %c0_17 = arith.constant 0 : index
    %c0_18 = arith.constant 0 : index
    %20 = vector.load %arg7[%c0_17, %c0_18] : memref<16x4xf32, #tpu.memory_space<vmem>>, vector<8x1xf32>
    %21 = vector.broadcast %20 : vector<8x1xf32> to vector<8x128xf32>
    %22 = arith.addf %19, %21 : vector<8x128xf32>
    %cst_19 = arith.constant 0.000000e+00 : f32
    %23 = vector.broadcast %cst_19 : f32 to vector<8x128xf32>
    %24 = arith.maximumf %22, %23 : vector<8x128xf32>
    %c8 = arith.constant 8 : index
    %c0_20 = arith.constant 0 : index
    %25 = vector.load %arg6[%c8, %c0_20] : memref<40x8xf32, #tpu.memory_space<vmem>>, vector<16x8xf32>
    %cst_21 = arith.constant dense<0.000000e+00> : vector<16x128xf32>
    %26 = tpu.matmul %25, %24, %cst_21 {dimension_numbers = #tpu.dot_dimension_numbers<[1], [0], [0], [1], [0, 0, 1, 1], [], []>} : vector<16x8xf32>, vector<8x128xf32>, vector<16x128xf32> -> vector<16x128xf32>
    %c0_22 = arith.constant 0 : index
    %c1_23 = arith.constant 1 : index
    %27 = vector.load %arg7[%c0_22, %c1_23] : memref<16x4xf32, #tpu.memory_space<vmem>>, vector<16x1xf32>
    %28 = vector.broadcast %27 : vector<16x1xf32> to vector<16x128xf32>
    %29 = arith.addf %26, %28 : vector<16x128xf32>
    %c0_24 = arith.constant 0 : index
    %c2 = arith.constant 2 : index
    %30 = vector.load %arg7[%c0_24, %c2] : memref<16x4xf32, #tpu.memory_space<vmem>>, vector<16x1xf32>
    %c0_25 = arith.constant 0 : index
    %c0_26 = arith.constant 0 : index
    %c0_27 = arith.constant 0 : index
    %31 = vector.load %arg2[%c0_25, %c0_26, %c0_27] : memref<1x1x128xf32, #tpu.memory_space<vmem>>, vector<1x1x128xf32>
    %32 = vector.shape_cast %31 : vector<1x1x128xf32> to vector<1x128xf32>
    %33 = vector.broadcast %30 : vector<16x1xf32> to vector<16x128xf32>
    %34 = vector.broadcast %32 : vector<1x128xf32> to vector<16x128xf32>
    %35 = arith.mulf %33, %34 : vector<16x128xf32>
    %36 = arith.addf %29, %35 : vector<16x128xf32>
    %37 = vector.extract_strided_slice %36 {offsets = [0, 0], sizes = [8, 128], strides = [1, 1]} : vector<16x128xf32> to vector<8x128xf32>
    %38 = arith.negf %37 : vector<8x128xf32>
    %39 = math.exp %38 : vector<8x128xf32>
    %cst_28 = arith.constant 1.000000e+00 : f32
    %40 = vector.broadcast %cst_28 : f32 to vector<8x128xf32>
    %41 = arith.addf %40, %39 : vector<8x128xf32>
    %42 = arith.divf %40, %41 : vector<8x128xf32>
    %43 = vector.extract_strided_slice %36 {offsets = [8, 0], sizes = [8, 128], strides = [1, 1]} : vector<16x128xf32> to vector<8x128xf32>
    %44 = math.tanh %43 : vector<8x128xf32>
    %45 = arith.mulf %42, %44 : vector<8x128xf32>
    %c24 = arith.constant 24 : index
    %c0_29 = arith.constant 0 : index
    %46 = vector.load %arg6[%c24, %c0_29] : memref<40x8xf32, #tpu.memory_space<vmem>>, vector<16x8xf32>
    %cst_30 = arith.constant dense<0.000000e+00> : vector<16x128xf32>
    %47 = tpu.matmul %46, %45, %cst_30 {dimension_numbers = #tpu.dot_dimension_numbers<[1], [0], [0], [1], [0, 0, 1, 1], [], []>} : vector<16x8xf32>, vector<8x128xf32>, vector<16x128xf32> -> vector<16x128xf32>
    %c0_31 = arith.constant 0 : index
    %c3 = arith.constant 3 : index
    %48 = vector.load %arg7[%c0_31, %c3] : memref<16x4xf32, #tpu.memory_space<vmem>>, vector<16x1xf32>
    %49 = vector.broadcast %48 : vector<16x1xf32> to vector<16x128xf32>
    %50 = arith.addf %47, %49 : vector<16x128xf32>
    %c0_32 = arith.constant 0 : index
    %c0_33 = arith.constant 0 : index
    %c0_34 = arith.constant 0 : index
    %51 = vector.load %arg1[%c0_32, %c0_33, %c0_34] : memref<1x8x128xf32, #tpu.memory_space<vmem>>, vector<1x8x128xf32>
    %52 = vector.shape_cast %51 : vector<1x8x128xf32> to vector<8x128xf32>
    %53 = vector.extract_strided_slice %50 {offsets = [0, 0], sizes = [8, 128], strides = [1, 1]} : vector<16x128xf32> to vector<8x128xf32>
    %54 = arith.addf %52, %53 : vector<8x128xf32>
    %cst_35 = arith.constant 0.707106769 : f32
    %55 = vector.broadcast %cst_35 : f32 to vector<8x128xf32>
    %56 = arith.mulf %54, %55 : vector<8x128xf32>
    %c0_36 = arith.constant 0 : index
    %c0_37 = arith.constant 0 : index
    %c0_38 = arith.constant 0 : index
    %57 = vector.load %arg8[%c0_36, %c0_37, %c0_38] : memref<1x8x128xf32, #tpu.memory_space<vmem>>, vector<1x8x128xf32>
    %58 = vector.shape_cast %57 : vector<1x8x128xf32> to vector<8x128xf32>
    %59 = vector.shape_cast %56 : vector<8x128xf32> to vector<1x8x128xf32>
    tpu.vector_store %arg8[%c0_36, %c0_37, %c0_38], %59 {strides = array<i32>} : memref<1x8x128xf32, #tpu.memory_space<vmem>>, vector<1x8x128xf32>,
    %60 = vector.extract_strided_slice %50 {offsets = [8, 0], sizes = [8, 128], strides = [1, 1]} : vector<16x128xf32> to vector<8x128xf32>
    %c0_39 = arith.constant 0 : index
    %c0_40 = arith.constant 0 : index
    %c0_41 = arith.constant 0 : index
    %61 = vector.load %arg9[%c0_39, %c0_40, %c0_41] : memref<1x8x128xf32, #tpu.memory_space<vmem>>, vector<1x8x128xf32>
    %62 = vector.shape_cast %61 : vector<1x8x128xf32> to vector<8x128xf32>
    %63 = vector.shape_cast %60 : vector<8x128xf32> to vector<1x8x128xf32>
    tpu.vector_store %arg9[%c0_39, %c0_40, %c0_41], %63 {strides = array<i32>} : memref<1x8x128xf32, #tpu.memory_space<vmem>>, vector<1x8x128xf32>,
    return
  }
  func.func @transform_0(%arg0: i32) -> (i32, i32, i32) {
    %c0_i32 = arith.constant 0 : i32
    %c0_i32_0 = arith.constant 0 : i32
    %c0_i32_1 = arith.constant 0 : i32
    return %arg0, %c0_i32, %c0_i32_0 : i32, i32, i32
  }
  func.func @transform_1(%arg0: i32) -> (i32, i32, i32) {
    %c0_i32 = arith.constant 0 : i32
    %c0_i32_0 = arith.constant 0 : i32
    %c0_i32_1 = arith.constant 0 : i32
    return %arg0, %c0_i32, %c0_i32_0 : i32, i32, i32
  }
  func.func @transform_2(%arg0: i32) -> (i32, i32, i32) {
    %c0_i32 = arith.constant 0 : i32
    %c0_i32_0 = arith.constant 0 : i32
    %c0_i32_1 = arith.constant 0 : i32
    return %arg0, %c0_i32, %c0_i32_0 : i32, i32, i32
  }
  func.func @transform_3(%arg0: i32) -> (i32, i32, i32) {
    %c0_i32 = arith.constant 0 : i32
    %c0_i32_0 = arith.constant 0 : i32
    %c0_i32_1 = arith.constant 0 : i32
    %c0_i32_2 = arith.constant 0 : i32
    return %c0_i32, %c0_i32_0, %c0_i32_1 : i32, i32, i32
  }
  func.func @transform_4(%arg0: i32) -> (i32, i32) {
    %c0_i32 = arith.constant 0 : i32
    %c0_i32_0 = arith.constant 0 : i32
    %c0_i32_1 = arith.constant 0 : i32
    return %c0_i32, %c0_i32_0 : i32, i32
  }
  func.func @transform_5(%arg0: i32) -> (i32, i32) {
    %c0_i32 = arith.constant 0 : i32
    %c0_i32_0 = arith.constant 0 : i32
    %c0_i32_1 = arith.constant 0 : i32
    return %c0_i32, %c0_i32_0 : i32, i32
  }
  func.func @transform_6(%arg0: i32) -> (i32, i32) {
    %c0_i32 = arith.constant 0 : i32
    %c0_i32_0 = arith.constant 0 : i32
    %c0_i32_1 = arith.constant 0 : i32
    return %c0_i32, %c0_i32_0 : i32, i32
  }
  func.func @transform_7(%arg0: i32) -> (i32, i32, i32) {
    %c0_i32 = arith.constant 0 : i32
    %c0_i32_0 = arith.constant 0 : i32
    %c0_i32_1 = arith.constant 0 : i32
    return %arg0, %c0_i32, %c0_i32_0 : i32, i32, i32
  }
  func.func @transform_8(%arg0: i32) -> (i32, i32, i32) {
    %c0_i32 = arith.constant 0 : i32
    %c0_i32_0 = arith.constant 0 : i32
    %c0_i32_1 = arith.constant 0 : i32
    return %arg0, %c0_i32, %c0_i32_0 : i32, i32, i32
  }
}

</mosaic_0001>

<llo_original>
// kernel: squeeze.1
$region0: #{squeeze.1}
  %s0 = inlined_call_operand.vmem [shape: f32[2,1,16,8], index: 0, kind: input, shape index: {}]
  %s1 = inlined_call_operand.vmem [shape: f32[2,1,128], index: 1, kind: output, shape index: {}]
  $region1: #{squeeze.1} parent=0
    #allocation0 [shape = 'u8[4096]{0}', space=vmem, size = 0x1000, scoped, tag = 'scoped mem for output reshape']
    %s2 = smov 3
    %v3 = vld [vmem:[%s0] ss:$16 sm:%s2]
    %vm4 = vcmask 64512
    %5 = vst.msk [vmem:[#allocation0] sm:$0x3] %vm4, %v3
    %s6 = scalar_lea.vmem %s0, 15
    %s7 = smov 3
    %v8 = vld [vmem:[%s6] ss:$16 sm:%s7]
    %9 = vrot.lane.b32.xlu0 %v8, 120
    %v10 = vpop.permute.xlu0 %9
    %vm11 = vcmask 1048512
    %12 = vst.msk [vmem:[#allocation0] sm:$0x3] %vm11, %v10
    %s13 = scalar_lea.vmem %s0, 14
    %s14 = smov 3
    %v15 = vld [vmem:[%s13] ss:$16 sm:%s14]
    %16 = vrot.lane.b32.xlu0 %v15, 112
    %v17 = vpop.permute.xlu0 %16
    %vm18 = vcmask 982912
    %19 = vst.msk [vmem:[#allocation0] sm:$0x3] %vm18, %v17
    %s20 = scalar_lea.vmem %s0, 13
    %s21 = smov 3
    %v22 = vld [vmem:[%s20] ss:$16 sm:%s21]
    %23 = vrot.lane.b32.xlu0 %v22, 104
    %v24 = vpop.permute.xlu0 %23
    %vm25 = vcmask 917312
    %26 = vst.msk [vmem:[#allocation0] sm:$0x3] %vm25, %v24
    %s27 = scalar_lea.vmem %s0, 12
    %s28 = smov 3
    %v29 = vld [vmem:[%s27] ss:$16 sm:%s28]
    %30 = vrot.lane.b32.xlu0 %v29, 96
    %v31 = vpop.permute.xlu0 %30
    %vm32 = vcmask 851712
    %33 = vst.msk [vmem:[#allocation0] sm:$0x3] %vm32, %v31
    %s34 = scalar_lea.vmem %s0, 11
    %s35 = smov 3
    %v36 = vld [vmem:[%s34] ss:$16 sm:%s35]
    %37 = vrot.lane.b32.xlu0 %v36, 88
    %v38 = vpop.permute.xlu0 %37
    %vm39 = vcmask 786112
    %40 = vst.msk [vmem:[#allocation0] sm:$0x3] %vm39, %v38
    %s41 = scalar_lea.vmem %s0, 10
    %s42 = smov 3
    %v43 = vld [vmem:[%s41] ss:$16 sm:%s42]
    %44 = vrot.lane.b32.xlu0 %v43, 80
    %v45 = vpop.permute.xlu0 %44
    %vm46 = vcmask 720512
    %47 = vst.msk [vmem:[#allocation0] sm:$0x3] %vm46, %v45
    %s48 = scalar_lea.vmem %s0, 9
    %s49 = smov 3
    %v50 = vld [vmem:[%s48] ss:$16 sm:%s49]
    %51 = vrot.lane.b32.xlu0 %v50, 72
    %v52 = vpop.permute.xlu0 %51
    %vm53 = vcmask 654912
    %54 = vst.msk [vmem:[#allocation0] sm:$0x3] %vm53, %v52
    %s55 = scalar_lea.vmem %s0, 8
    %s56 = smov 3
    %v57 = vld [vmem:[%s55] ss:$16 sm:%s56]
    %58 = vrot.lane.b32.xlu0 %v57, 64
    %v59 = vpop.permute.xlu0 %58
    %vm60 = vcmask 589312
    %61 = vst.msk [vmem:[#allocation0] sm:$0x3] %vm60, %v59
    %s62 = scalar_lea.vmem %s0, 7
    %s63 = smov 3
    %v64 = vld [vmem:[%s62] ss:$16 sm:%s63]
    %65 = vrot.lane.b32.xlu0 %v64, 56
    %v66 = vpop.permute.xlu0 %65
    %vm67 = vcmask 523712
    %68 = vst.msk [vmem:[#allocation0] sm:$0x3] %vm67, %v66
    %s69 = scalar_lea.vmem %s0, 6
    %s70 = smov 3
    %v71 = vld [vmem:[%s69] ss:$16 sm:%s70]
    %72 = vrot.lane.b32.xlu0 %v71, 48
    %v73 = vpop.permute.xlu0 %72
    %vm74 = vcmask 458112
    %75 = vst.msk [vmem:[#allocation0] sm:$0x3] %vm74, %v73
    %s76 = scalar_lea.vmem %s0, 5
    %s77 = smov 3
    %v78 = vld [vmem:[%s76] ss:$16 sm:%s77]
    %79 = vrot.lane.b32.xlu0 %v78, 40
    %v80 = vpop.permute.xlu0 %79
    %vm81 = vcmask 392512
    %82 = vst.msk [vmem:[#allocation0] sm:$0x3] %vm81, %v80
    %s83 = scalar_lea.vmem %s0, 4
    %s84 = smov 3
    %v85 = vld [vmem:[%s83] ss:$16 sm:%s84]
    %86 = vrot.lane.b32.xlu0 %v85, 32
    %v87 = vpop.permute.xlu0 %86
    %vm88 = vcmask 326912
    %89 = vst.msk [vmem:[#allocation0] sm:$0x3] %vm88, %v87
    %s90 = scalar_lea.vmem %s0, 3
    %s91 = smov 3
    %v92 = vld [vmem:[%s90] ss:$16 sm:%s91]
    %93 = vrot.lane.b32.xlu0 %v92, 24
    %v94 = vpop.permute.xlu0 %93
    %vm95 = vcmask 261312
    %96 = vst.msk [vmem:[#allocation0] sm:$0x3] %vm95, %v94
    %s97 = scalar_lea.vmem %s0, 2
    %s98 = smov 3
    %v99 = vld [vmem:[%s97] ss:$16 sm:%s98]
    %100 = vrot.lane.b32.xlu0 %v99, 16
    %v101 = vpop.permute.xlu0 %100
    %vm102 = vcmask 195712
    %103 = vst.msk [vmem:[#allocation0] sm:$0x3] %vm102, %v101
    %s104 = scalar_lea.vmem %s0, 1
    %s105 = smov 3
    %v106 = vld [vmem:[%s104] ss:$16 sm:%s105]
    %107 = vrot.lane.b32.xlu0 %v106, 8
    %v108 = vpop.permute.xlu0 %107
    %vm109 = vcmask 130112
    %110 = vst.msk [vmem:[#allocation0] sm:$0x3] %vm109, %v108
    %s112 = sshll.u32 1, 2
    %s113 = ssub.s32 %s112, 1
    %v115 = vld [vmem:[#allocation0] sm:%s113]
    %s116 = sshll.u32 1, 2
    %s117 = ssub.s32 %s116, 1
    %118 = vst [vmem:[%s1] sm:%s117] %v115

// kernel: gcn_residual_block.1
$region0: #{gcn_residual_block.1}
  #allocation0 [shape = 'u32[]', space=smem, size = 0x4, offset = 0x4, fixed_abs, tag = 'smem constant byte address 0x4 - core index']
  #allocation1 [shape = 'u32[144,128]{1,0:T(1,128)}', space=vmem, size = 0x12000, scoped, tag = 'internal scratch']
  %s0 = inlined_call_operand.vmem [shape: f32[2,8,128], index: 0, kind: input, shape index: {}]
  %s1 = inlined_call_operand.vmem [shape: f32[2,1,128], index: 1, kind: input, shape index: {}]
  %s2 = inlined_call_operand.vmem [shape: f32[2,8,1], index: 2, kind: input, shape index: {}]
  %s3 = inlined_call_operand.vmem [shape: bf16[2,128,128], index: 3, kind: input, shape index: {}]
  %s4 = inlined_call_operand.vmem [shape: f32[1,128], index: 4, kind: input, shape index: {}]
  %s5 = inlined_call_operand.vmem [shape: f32[40,8], index: 5, kind: input, shape index: {}]
  %s6 = inlined_call_operand.vmem [shape: f32[16,4], index: 6, kind: input, shape index: {}]
  %s7 = inlined_call_operand.vmem [shape: f32[2,8,128], index: 7, kind: output, shape index: {0}]
  %s8 = inlined_call_operand.vmem [shape: f32[2,8,128], index: 8, kind: output, shape index: {1}]
  %9 = xla_tuple %s7, %s8
  %s10 = sld [smem:[#allocation0]]
  $region69: #{gcn_residual_block.1} parent=0
    _
  %s12 = ssub.s32 1, %s10
  %s13 = scalar_select 0, %s12, %s10
  loop: start=0, step=1, limit=4
  $region2: #{gcn_residual_block.1} parent=0 // loop_pre_header
    _
  $region3: #{gcn_residual_block.1} parent=0 // loop_header
    %s15 = sphi 0, %s19
    %p16 = scmp.ge.s32.totalorder %s15, 4
    %s25 = sphi 0, %s27
    %s28 = sphi 0, %s25
    %s29 = sphi 0, %s28
    %s45 = sphi 0, %s29
    %s51 = sphi 0, %s53
    %s54 = sphi 0, %s51
    %s55 = sphi 0, %s54
    %s71 = sphi 0, %s55
    %s77 = sphi 0, %s79
    %s80 = sphi 0, %s77
    %s81 = sphi 0, %s80
    %s97 = sphi 0, %s81
    %s101 = sphi 0, %s101
    %s103 = sphi 0, %s101
    %s104 = sphi 0, %s103
    %s118 = sphi 0, %s104
    %s122 = sphi 0, %s122
    %s124 = sphi 0, %s122
    %s125 = sphi 0, %s124
    %s139 = sphi 0, %s125
    %s143 = sphi 0, %s143
    %s145 = sphi 0, %s143
    %s146 = sphi 0, %s145
    %s160 = sphi 0, %s146
    %s164 = sphi 0, %s164
    %s166 = sphi 0, %s164
    %s167 = sphi 0, %s166
    %s181 = sphi 0, %s167
    %s187 = sphi 0, %s189
    %s190 = sphi 0, %s187
    %s191 = sphi 0, %s190
    %s207 = sphi 0, %s191
    %s213 = sphi 0, %s215
    %s216 = sphi 0, %s213
    %s217 = sphi 0, %s216
    %s233 = sphi 0, %s217
  $region4: #{gcn_residual_block.1} parent=0 // loop_header_branch
    %18 = sbr.rel (%p16) target = $region8
  $region5: #{gcn_residual_block.1} parent=0 // loop_body
    %s20 = ssub.s32 %s15, 1
    %s21 = ssub.s32 %s15, 2
    %s22 = sadd.s32 %s15, 1
    %s23 = ssub.s32 %s15, %s22
    %p24 = scmp.eq.s32.totalorder %s23, 0
    %s26 = sadd.s32 %s25, 1
    %s27 = scalar_select %p24, %s25, %s26
    %p30 = pneg %p24
    %p31 = scmp.eq.s32.totalorder %s15, 1
    %p32 = por %p30, %p31
    %p33 = scmp.ne.s32.totalorder %s25, %s28
    %p34 = scmp.eq.s32.totalorder %s15, 0
    %p35 = por %p33, %p34
    %p36 = scmp.ne.s32.totalorder %s25, %s28
    %p37 = scmp.eq.s32.totalorder %s20, 1
    %p38 = por %p36, %p37
    %p39 = scmp.ne.s32.totalorder %s28, %s29
    %p40 = scmp.eq.s32.totalorder %s20, 0
    %p41 = por %p39, %p40
    %p42 = scmp.ne.s32.totalorder %s28, %s29
    %p43 = scmp.eq.s32.totalorder %s21, 1
    %p44 = por %p42, %p43
    %p46 = scmp.ne.s32.totalorder %s29, %s45
    %p47 = scmp.eq.s32.totalorder %s21, 0
    %p48 = por %p46, %p47
    %s49 = ssub.s32 %s15, %s22
    %p50 = scmp.eq.s32.totalorder %s49, 0
    %s52 = sadd.s32 %s51, 1
    %s53 = scalar_select %p50, %s51, %s52
    %p56 = pneg %p50
    %p57 = scmp.eq.s32.totalorder %s15, 1
    %p58 = por %p56, %p57
    %p59 = scmp.ne.s32.totalorder %s51, %s54
    %p60 = scmp.eq.s32.totalorder %s15, 0
    %p61 = por %p59, %p60
    %p62 = scmp.ne.s32.totalorder %s51, %s54
    %p63 = scmp.eq.s32.totalorder %s20, 1
    %p64 = por %p62, %p63
    %p65 = scmp.ne.s32.totalorder %s54, %s55
    %p66 = scmp.eq.s32.totalorder %s20, 0
    %p67 = por %p65, %p66
    %p68 = scmp.ne.s32.totalorder %s54, %s55
    %p69 = scmp.eq.s32.totalorder %s21, 1
    %p70 = por %p68, %p69
    %p72 = scmp.ne.s32.totalorder %s55, %s71
    %p73 = scmp.eq.s32.totalorder %s21, 0
    %p74 = por %p72, %p73
    %s75 = ssub.s32 %s15, %s22
    %p76 = scmp.eq.s32.totalorder %s75, 0
    %s78 = sadd.s32 %s77, 1
    %s79 = scalar_select %p76, %s77, %s78
    %p82 = pneg %p76
    %p83 = scmp.eq.s32.totalorder %s15, 1
    %p84 = por %p82, %p83
    %p85 = scmp.ne.s32.totalorder %s77, %s80
    %p86 = scmp.eq.s32.totalorder %s15, 0
    %p87 = por %p85, %p86
    %p88 = scmp.ne.s32.totalorder %s77, %s80
    %p89 = scmp.eq.s32.totalorder %s20, 1
    %p90 = por %p88, %p89
    %p91 = scmp.ne.s32.totalorder %s80, %s81
    %p92 = scmp.eq.s32.totalorder %s20, 0
    %p93 = por %p91, %p92
    %p94 = scmp.ne.s32.totalorder %s80, %s81
    %p95 = scmp.eq.s32.totalorder %s21, 1
    %p96 = por %p94, %p95
    %p98 = scmp.ne.s32.totalorder %s81, %s97
    %p99 = scmp.eq.s32.totalorder %s21, 0
    %p100 = por %p98, %p99
    %s102 = sadd.s32 %s101, 1
    %p105 = scmp.eq.s32.totalorder %s15, 1
    %p106 = scmp.ne.s32.totalorder %s101, %s103
    %p107 = scmp.eq.s32.totalorder %s15, 0
    %p108 = por %p106, %p107
    %p109 = scmp.ne.s32.totalorder %s101, %s103
    %p110 = scmp.eq.s32.totalorder %s20, 1
    %p111 = por %p109, %p110
    %p112 = scmp.ne.s32.totalorder %s103, %s104
    %p113 = scmp.eq.s32.totalorder %s20, 0
    %p114 = por %p112, %p113
    %p115 = scmp.ne.s32.totalorder %s103, %s104
    %p116 = scmp.eq.s32.totalorder %s21, 1
    %p117 = por %p115, %p116
    %p119 = scmp.ne.s32.totalorder %s104, %s118
    %p120 = scmp.eq.s32.totalorder %s21, 0
    %p121 = por %p119, %p120
    %s123 = sadd.s32 %s122, 1
    %p126 = scmp.eq.s32.totalorder %s15, 1
    %p127 = scmp.ne.s32.totalorder %s122, %s124
    %p128 = scmp.eq.s32.totalorder %s15, 0
    %p129 = por %p127, %p128
    %p130 = scmp.ne.s32.totalorder %s122, %s124
    %p131 = scmp.eq.s32.totalorder %s20, 1
    %p132 = por %p130, %p131
    %p133 = scmp.ne.s32.totalorder %s124, %s125
    %p134 = scmp.eq.s32.totalorder %s20, 0
    %p135 = por %p133, %p134
    %p136 = scmp.ne.s32.totalorder %s124, %s125
    %p137 = scmp.eq.s32.totalorder %s21, 1
    %p138 = por %p136, %p137
    %p140 = scmp.ne.s32.totalorder %s125, %s139
    %p141 = scmp.eq.s32.totalorder %s21, 0
    %p142 = por %p140, %p141
    %s144 = sadd.s32 %s143, 1
    %p147 = scmp.eq.s32.totalorder %s15, 1
    %p148 = scmp.ne.s32.totalorder %s143, %s145
    %p149 = scmp.eq.s32.totalorder %s15, 0
    %p150 = por %p148, %p149
    %p151 = scmp.ne.s32.totalorder %s143, %s145
    %p152 = scmp.eq.s32.totalorder %s20, 1
    %p153 = por %p151, %p152
    %p154 = scmp.ne.s32.totalorder %s145, %s146
    %p155 = scmp.eq.s32.totalorder %s20, 0
    %p156 = por %p154, %p155
    %p157 = scmp.ne.s32.totalorder %s145, %s146
    %p158 = scmp.eq.s32.totalorder %s21, 1
    %p159 = por %p157, %p158
    %p161 = scmp.ne.s32.totalorder %s146, %s160
    %p162 = scmp.eq.s32.totalorder %s21, 0
    %p163 = por %p161, %p162
    %s165 = sadd.s32 %s164, 1
    %p168 = scmp.eq.s32.totalorder %s15, 1
    %p169 = scmp.ne.s32.totalorder %s164, %s166
    %p170 = scmp.eq.s32.totalorder %s15, 0
    %p171 = por %p169, %p170
    %p172 = scmp.ne.s32.totalorder %s164, %s166
    %p173 = scmp.eq.s32.totalorder %s20, 1
    %p174 = por %p172, %p173
    %p175 = scmp.ne.s32.totalorder %s166, %s167
    %p176 = scmp.eq.s32.totalorder %s20, 0
    %p177 = por %p175, %p176
    %p178 = scmp.ne.s32.totalorder %s166, %s167
    %p179 = scmp.eq.s32.totalorder %s21, 1
    %p180 = por %p178, %p179
    %p182 = scmp.ne.s32.totalorder %s167, %s181
    %p183 = scmp.eq.s32.totalorder %s21, 0
    %p184 = por %p182, %p183
    %s185 = ssub.s32 %s15, %s22
    %p186 = scmp.eq.s32.totalorder %s185, 0
    %s188 = sadd.s32 %s187, 1
    %s189 = scalar_select %p186, %s187, %s188
    %p192 = pneg %p186
    %p193 = scmp.eq.s32.totalorder %s15, 1
    %p194 = por %p192, %p193
    %p195 = scmp.ne.s32.totalorder %s187, %s190
    %p196 = scmp.eq.s32.totalorder %s15, 0
    %p197 = por %p195, %p196
    %p198 = scmp.ne.s32.totalorder %s187, %s190
    %p199 = scmp.eq.s32.totalorder %s20, 1
    %p200 = por %p198, %p199
    %p201 = scmp.ne.s32.totalorder %s190, %s191
    %p202 = scmp.eq.s32.totalorder %s20, 0
    %p203 = por %p201, %p202
    %p204 = scmp.ne.s32.totalorder %s190, %s191
    %p205 = scmp.eq.s32.totalorder %s21, 1
    %p206 = por %p204, %p205
    %p208 = scmp.ne.s32.totalorder %s191, %s207
    %p209 = scmp.eq.s32.totalorder %s21, 0
    %p210 = por %p208, %p209
    %s211 = ssub.s32 %s15, %s22
    %p212 = scmp.eq.s32.totalorder %s211, 0
    %s214 = sadd.s32 %s213, 1
    %s215 = scalar_select %p212, %s213, %s214
    %p218 = pneg %p212
    %p219 = scmp.eq.s32.totalorder %s15, 1
    %p220 = por %p218, %p219
    %p221 = scmp.ne.s32.totalorder %s213, %s216
    %p222 = scmp.eq.s32.totalorder %s15, 0
    %p223 = por %p221, %p222
    %p224 = scmp.ne.s32.totalorder %s213, %s216
    %p225 = scmp.eq.s32.totalorder %s20, 1
    %p226 = por %p224, %p225
    %p227 = scmp.ne.s32.totalorder %s216, %s217
    %p228 = scmp.eq.s32.totalorder %s20, 0
    %p229 = por %p227, %p228
    %p230 = scmp.ne.s32.totalorder %s216, %s217
    %p231 = scmp.eq.s32.totalorder %s21, 1
    %p232 = por %p230, %p231
    %p234 = scmp.ne.s32.totalorder %s217, %s233
    %p235 = scmp.eq.s32.totalorder %s21, 0
    %p236 = por %p234, %p235
    %p237 = scmp.le.s32.totalorder 1, %s15
    %p238 = scmp.lt.s32.totalorder %s15, 3
    %p239 = pnand %p237, %p238
    %p240 = pneg %p239
    // Predicated region
    $region9: #{gcn_residual_block.1} parent=5 // pred_check
      _
    $region10: #{gcn_residual_block.1} parent=5 // pred_check_branch
      %242 = sbr.rel (%p239) target = $region12
    $region11: #{gcn_residual_block.1} parent=5 // pred_region
      %s243 = ssub.s32 %s15, 1
      // Predicated region
      $region13: #{gcn_residual_block.1} parent=11 // pred_check
        %p244 = pneg %p114
      $region14: #{gcn_residual_block.1} parent=11 // pred_check_branch
        %246 = sbr.rel (%p244) target = $region16
      $region15: #{gcn_residual_block.1} parent=11 // pred_region
        _
      $region16: #{gcn_residual_block.1} parent=11 // pred_fallthru
        _
      // Predicated region
      $region17: #{gcn_residual_block.1} parent=11 // pred_check
        %p247 = pneg %p135
      $region18: #{gcn_residual_block.1} parent=11 // pred_check_branch
        %249 = sbr.rel (%p247) target = $region20
      $region19: #{gcn_residual_block.1} parent=11 // pred_region
        _
      $region20: #{gcn_residual_block.1} parent=11 // pred_fallthru
        _
      // Predicated region
      $region21: #{gcn_residual_block.1} parent=11 // pred_check
        %p250 = pneg %p156
      $region22: #{gcn_residual_block.1} parent=11 // pred_check_branch
        %252 = sbr.rel (%p250) target = $region24
      $region23: #{gcn_residual_block.1} parent=11 // pred_region
        _
      $region24: #{gcn_residual_block.1} parent=11 // pred_fallthru
        _
      // Predicated region
      $region25: #{gcn_residual_block.1} parent=11 // pred_check
        %p253 = pneg %p177
      $region26: #{gcn_residual_block.1} parent=11 // pred_check_branch
        %255 = sbr.rel (%p253) target = $region28
      $region27: #{gcn_residual_block.1} parent=11 // pred_region
        _
      $region28: #{gcn_residual_block.1} parent=11 // pred_fallthru
        _
    $region12: #{gcn_residual_block.1} parent=5 // pred_fallthru
      _
    %p256 = scmp.lt.s32.totalorder %s15, 2
    // Predicated region
    $region29: #{gcn_residual_block.1} parent=5 // pred_check
      %p257 = pneg %p256
    $region30: #{gcn_residual_block.1} parent=5 // pred_check_branch
      %259 = sbr.rel (%p257) target = $region32
    $region31: #{gcn_residual_block.1} parent=5 // pred_region
      // Predicated region
      $region33: #{gcn_residual_block.1} parent=31 // pred_check
        %p260 = pneg %p35
      $region34: #{gcn_residual_block.1} parent=31 // pred_check_branch
        %262 = sbr.rel (%p260) target = $region36
      $region35: #{gcn_residual_block.1} parent=31 // pred_region
        %p263 = scmp.lt.s32.totalorder %s15, 1
        %s264 = scalar_select %p263, %s15, 1
        %s265 = smul.addr %s264, 8
        %s266 = scalar_lea.vmem %s0, %s265
      $region36: #{gcn_residual_block.1} parent=31 // pred_fallthru
        _
      // Predicated region
      $region37: #{gcn_residual_block.1} parent=31 // pred_check
        %p267 = pneg %p61
      $region38: #{gcn_residual_block.1} parent=31 // pred_check_branch
        %269 = sbr.rel (%p267) target = $region40
      $region39: #{gcn_residual_block.1} parent=31 // pred_region
        %p270 = scmp.lt.s32.totalorder %s15, 1
        %s271 = scalar_select %p270, %s15, 1
        %s272 = scalar_lea.vmem %s1, %s271
      $region40: #{gcn_residual_block.1} parent=31 // pred_fallthru
        _
      // Predicated region
      $region41: #{gcn_residual_block.1} parent=31 // pred_check
        %p273 = pneg %p87
      $region42: #{gcn_residual_block.1} parent=31 // pred_check_branch
        %275 = sbr.rel (%p273) target = $region44
      $region43: #{gcn_residual_block.1} parent=31 // pred_region
        %p276 = scmp.lt.s32.totalorder %s15, 1
        %s277 = scalar_select %p276, %s15, 1
        %s278 = smul.addr %s277, 8
        %s279 = scalar_lea.vmem %s2, %s278
      $region44: #{gcn_residual_block.1} parent=31 // pred_fallthru
        _
    $region32: #{gcn_residual_block.1} parent=5 // pred_fallthru
      _
    %p280 = scmp.le.s32.totalorder 1, %s15
    %p281 = scmp.lt.s32.totalorder %s15, 3
    %p282 = pnand %p280, %p281
    %p283 = pneg %p282
    // Predicated region
    $region45: #{gcn_residual_block.1} parent=5 // pred_check
      _
    $region46: #{gcn_residual_block.1} parent=5 // pred_check_branch
      %285 = sbr.rel (%p282) target = $region48
    $region47: #{gcn_residual_block.1} parent=5 // pred_region
      %s286 = ssub.s32 %s15, 1
      %p287 = scmp.lt.s32.totalorder %s20, 1
      %s288 = scalar_select %p287, %s20, 1
      %s289 = smul.addr %s288, 8
      %s290 = scalar_lea.vmem %s0, %s289
      %p291 = pneg %p41
      %p292 = pneg %p38
      %p293 = scmp.lt.s32.totalorder %s20, 1
      %s294 = scalar_select %p293, %s20, 1
      %s295 = scalar_lea.vmem %s1, %s294
      %p296 = pneg %p67
      %p297 = pneg %p64
      %p298 = scmp.lt.s32.totalorder %s20, 1
      %s299 = scalar_select %p298, %s20, 1
      %s300 = smul.addr %s299, 8
      %s301 = scalar_lea.vmem %s2, %s300
      %p302 = pneg %p93
      %p303 = pneg %p90
      %p304 = pneg %p114
      %p305 = pneg %p111
      %p306 = pneg %p135
      %p307 = pneg %p132
      %p308 = pneg %p156
      %p309 = pneg %p153
      %p310 = pneg %p177
      %p311 = pneg %p174
      %p312 = pneg %p203
      %p313 = pneg %p200
      %p314 = scmp.lt.s32.totalorder %s20, 1
      %s315 = scalar_select %p314, %s20, 1
      %s316 = smul.addr %s315, 8
      %s317 = scalar_lea.vmem %s7, %s316
      %p318 = pneg %p229
      %p319 = pneg %p226
      %p320 = scmp.lt.s32.totalorder %s20, 1
      %s321 = scalar_select %p320, %s20, 1
      %s322 = smul.addr %s321, 8
      %s323 = scalar_lea.vmem %s8, %s322
      %p324 = scmp.lt.s32.totalorder %s20, 1
      %s325 = scalar_select %p324, %s20, 1
      %s326 = smul.addr %s325, 8
      %s327 = scalar_lea.vmem %s0, %s326
      %p328 = scmp.lt.s32.totalorder %s20, 1
      %s329 = scalar_select %p328, %s20, 1
      %s330 = scalar_lea.vmem %s1, %s329
      %p331 = scmp.lt.s32.totalorder %s20, 1
      %s332 = scalar_select %p331, %s20, 1
      %s333 = smul.addr %s332, 8
      %s334 = scalar_lea.vmem %s2, %s333
      %p335 = scmp.lt.s32.totalorder %s20, 1
      %s336 = scalar_select %p335, %s20, 1
      %s337 = smul.addr %s336, 8
      %s338 = scalar_lea.vmem %s7, %s337
      %p339 = scmp.lt.s32.totalorder %s20, 1
      %s340 = scalar_select %p339, %s20, 1
      %s341 = smul.addr %s340, 8
      %s342 = scalar_lea.vmem %s8, %s341
      %v344 = vld [vmem:[%s327] sm:$0xff]
      %v345 = vld [vmem:[%s334] sm:$0xff]
      %347 = vset.pattern.permute.xlu0 0
      %348 = vperm.xlu0 %347, %v345
      %v349 = vpop.permute.xlu0 %348
      %v351 = vadd.f32 %v344, %v349
      %v352 = vpack.c.bf16 %v351, %v351
      %v353 = vld [vmem:[%s3] sm:$0xf]
      %v354 = vld [vmem:[%s3 + $0x4] sm:$0xf]
      %v355 = vld [vmem:[%s3 + $0x8] sm:$0xf]
      %v356 = vld [vmem:[%s3 + $0xc] sm:$0xf]
      %v357 = vld [vmem:[%s3 + $0x10] sm:$0xf]
      %v358 = vld [vmem:[%s3 + $0x14] sm:$0xf]
      %v359 = vld [vmem:[%s3 + $0x18] sm:$0xf]
      %v360 = vld [vmem:[%s3 + $0x1c] sm:$0xf]
      %v361 = vld [vmem:[%s3 + $0x20] sm:$0xf]
      %v362 = vld [vmem:[%s3 + $0x24] sm:$0xf]
      %v363 = vld [vmem:[%s3 + $0x28] sm:$0xf]
      %v364 = vld [vmem:[%s3 + $0x2c] sm:$0xf]
      %v365 = vld [vmem:[%s3 + $0x30] sm:$0xf]
      %v366 = vld [vmem:[%s3 + $0x34] sm:$0xf]
      %v367 = vld [vmem:[%s3 + $0x38] sm:$0xf]
      %v368 = vld [vmem:[%s3 + $0x3c] sm:$0xf]
      %v369 = vld [vmem:[%s4] sm:$0x1]
      %v371 = vlaneseq
      %v372 = vshrl.u32 %v371, 7
      %v373 = vsub.s32 0, %v372
      %v374 = vrot.slane %v369, %v373
      %v392 = vunpack.c.l.b16 %v353
      %v393 = vunpack.c.l.b16 %v354
      %v394 = vunpack.c.l.b16 %v355
      %v395 = vunpack.c.l.b16 %v356
      %v396 = vunpack.c.l.b16 %v357
      %v397 = vunpack.c.l.b16 %v358
      %v398 = vunpack.c.l.b16 %v359
      %v399 = vunpack.c.l.b16 %v360
      %v400 = vunpack.c.l.b16 %v361
      %v401 = vunpack.c.l.b16 %v362
      %v402 = vunpack.c.l.b16 %v363
      %v403 = vunpack.c.l.b16 %v364
      %v404 = vunpack.c.l.b16 %v365
      %v405 = vunpack.c.l.b16 %v366
      %v406 = vunpack.c.l.b16 %v367
      %v407 = vunpack.c.l.b16 %v368
      %v408 = vpack.c.b16 %v393, %v392
      %v409 = vpack.c.b16 %v395, %v394
      %v410 = vpack.c.b16 %v397, %v396
      %v411 = vpack.c.b16 %v399, %v398
      %v412 = vpack.c.b16 %v401, %v400
      %v413 = vpack.c.b16 %v403, %v402
      %v414 = vpack.c.b16 %v405, %v404
      %v415 = vpack.c.b16 %v407, %v406
      %424 = vmatprep.subr.bf16.mxu0 0
      %425 = vmatpush1.bf16.msra.mxu0 %v415
      %426 = vmatprep.subr.bf16.mxu0 0
      %427 = vmatpush1.bf16.msra.mxu0 %v414
      %428 = vmatprep.subr.bf16.mxu0 0
      %429 = vmatpush1.bf16.msra.mxu0 %v413
      %430 = vmatprep.subr.bf16.mxu0 0
      %431 = vmatpush1.bf16.msra.mxu0 %v412
      %432 = vmatprep.subr.bf16.mxu0 0
      %433 = vmatpush1.bf16.msra.mxu0 %v411
      %434 = vmatprep.subr.bf16.mxu0 0
      %435 = vmatpush1.bf16.msra.mxu0 %v410
      %436 = vmatprep.subr.bf16.mxu0 0
      %437 = vmatpush1.bf16.msra.mxu0 %v409
      %438 = vmatprep.subr.bf16.mxu0 0
      %439 = vmatpush1.bf16.msra.mxu0 %v408
      %440 = vmatprep.subr.bf16.mxu0 0
      %441 = vmatpush2.bf16.msra.mxu0 0
      %442 = vmatprep.subr.bf16.mxu0 0
      %443 = vmatpush2.bf16.msra.mxu0 0
      %444 = vmatprep.subr.bf16.mxu0 0
      %445 = vmatpush2.bf16.msra.mxu0 0
      %446 = vmatprep.subr.bf16.mxu0 0
      %447 = vmatpush2.bf16.msra.mxu0 0
      %448 = vmatprep.subr.bf16.mxu0 0
      %449 = vmatpush2.bf16.msra.mxu0 0
      %450 = vmatprep.subr.bf16.mxu0 0
      %451 = vmatpush2.bf16.msra.mxu0 0
      %452 = vmatprep.subr.bf16.mxu0 0
      %453 = vmatpush2.bf16.msra.mxu0 0
      %454 = vmatprep.subr.bf16.mxu0 0
      %455 = vmatpush2.bf16.msra.mxu0 0
      %456 = vmatprep.mubr.bf16.mxu0 0
      %457 = vmatmul.mubr.bf16.gmra.mxu0 %v352
      %v458 = vpop.f32.mrf.mxu0
      %v459 = vadd.f32 %v374, %v458
      %v460 = vpop.f32.mrf.mxu0
      %v461 = vpop.f32.mrf.mxu0
      %v462 = vpop.f32.mrf.mxu0
      %463 = vdwg.mxu0
      %v464 = vmax.f32 %v459, 0.0
      %v465 = vpack.c.bf16 %v464, %v464
      %s466 = scalar_lea.vmem %s3, 64
      %v467 = vld [vmem:[%s466] sm:$0xf]
      %v468 = vld [vmem:[%s466 + $0x4] sm:$0xf]
      %v469 = vld [vmem:[%s466 + $0x8] sm:$0xf]
      %v470 = vld [vmem:[%s466 + $0xc] sm:$0xf]
      %v471 = vld [vmem:[%s466 + $0x10] sm:$0xf]
      %v472 = vld [vmem:[%s466 + $0x14] sm:$0xf]
      %v473 = vld [vmem:[%s466 + $0x18] sm:$0xf]
      %v474 = vld [vmem:[%s466 + $0x1c] sm:$0xf]
      %v475 = vld [vmem:[%s466 + $0x20] sm:$0xf]
      %v476 = vld [vmem:[%s466 + $0x24] sm:$0xf]
      %v477 = vld [vmem:[%s466 + $0x28] sm:$0xf]
      %v478 = vld [vmem:[%s466 + $0x2c] sm:$0xf]
      %v479 = vld [vmem:[%s466 + $0x30] sm:$0xf]
      %v480 = vld [vmem:[%s466 + $0x34] sm:$0xf]
      %v481 = vld [vmem:[%s466 + $0x38] sm:$0xf]
      %v482 = vld [vmem:[%s466 + $0x3c] sm:$0xf]
      %v499 = vunpack.c.l.b16 %v467
      %v500 = vunpack.c.l.b16 %v468
      %v501 = vunpack.c.l.b16 %v469
      %v502 = vunpack.c.l.b16 %v470
      %v503 = vunpack.c.l.b16 %v471
      %v504 = vunpack.c.l.b16 %v472
      %v505 = vunpack.c.l.b16 %v473
      %v506 = vunpack.c.l.b16 %v474
      %v507 = vunpack.c.l.b16 %v475
      %v508 = vunpack.c.l.b16 %v476
      %v509 = vunpack.c.l.b16 %v477
      %v510 = vunpack.c.l.b16 %v478
      %v511 = vunpack.c.l.b16 %v479
      %v512 = vunpack.c.l.b16 %v480
      %v513 = vunpack.c.l.b16 %v481
      %v514 = vunpack.c.l.b16 %v482
      %v515 = vpack.c.b16 %v500, %v499
      %v516 = vpack.c.b16 %v502, %v501
      %v517 = vpack.c.b16 %v504, %v503
      %v518 = vpack.c.b16 %v506, %v505
      %v519 = vpack.c.b16 %v508, %v507
      %v520 = vpack.c.b16 %v510, %v509
      %v521 = vpack.c.b16 %v512, %v511
      %v522 = vpack.c.b16 %v514, %v513
      %531 = vmatprep.subr.bf16.mxu0 0
      %532 = vmatpush1.bf16.msra.mxu0 %v522
      %533 = vmatprep.subr.bf16.mxu0 0
      %534 = vmatpush1.bf16.msra.mxu0 %v521
      %535 = vmatprep.subr.bf16.mxu0 0
      %536 = vmatpush1.bf16.msra.mxu0 %v520
      %537 = vmatprep.subr.bf16.mxu0 0
      %538 = vmatpush1.bf16.msra.mxu0 %v519
      %539 = vmatprep.subr.bf16.mxu0 0
      %540 = vmatpush1.bf16.msra.mxu0 %v518
      %541 = vmatprep.subr.bf16.mxu0 0
      %542 = vmatpush1.bf16.msra.mxu0 %v517
      %543 = vmatprep.subr.bf16.mxu0 0
      %544 = vmatpush1.bf16.msra.mxu0 %v516
      %545 = vmatprep.subr.bf16.mxu0 0
      %546 = vmatpush1.bf16.msra.mxu0 %v515
      %547 = vmatprep.subr.bf16.mxu0 0
      %548 = vmatpush2.bf16.msra.mxu0 0
      %549 = vmatprep.subr.bf16.mxu0 0
      %550 = vmatpush2.bf16.msra.mxu0 0
      %551 = vmatprep.subr.bf16.mxu0 0
      %552 = vmatpush2.bf16.msra.mxu0 0
      %553 = vmatprep.subr.bf16.mxu0 0
      %554 = vmatpush2.bf16.msra.mxu0 0
      %555 = vmatprep.subr.bf16.mxu0 0
      %556 = vmatpush2.bf16.msra.mxu0 0
      %557 = vmatprep.subr.bf16.mxu0 0
      %558 = vmatpush2.bf16.msra.mxu0 0
      %559 = vmatprep.subr.bf16.mxu0 0
      %560 = vmatpush2.bf16.msra.mxu0 0
      %561 = vmatprep.subr.bf16.mxu0 0
      %562 = vmatpush2.bf16.msra.mxu0 0
      %563 = vmatprep.mubr.bf16.mxu0 0
      %564 = vmatmul.mubr.bf16.gmra.mxu0 %v465
      %v565 = vpop.f32.mrf.mxu0
      %v566 = vadd.f32 0.0, %v565
      %v567 = vpop.f32.mrf.mxu0
      %v568 = vpop.f32.mrf.mxu0
      %v569 = vpop.f32.mrf.mxu0
      %570 = vdwg.mxu0
      %v571 = vld [vmem:[%s5] sm:$0xff]
      %v572 = vld [vmem:[%s6] sm:$0xff]
      %574 = vset.pattern.permute.xlu0 0
      %575 = vperm.xlu0 %574, %v572
      %v576 = vpop.permute.xlu0 %575
      %vm578 = vcmask 64512
      %v580 = vsel %vm578, %v571, 0
      %582 = vmatprep.subr.mxu0 0.0
      %583 = vmatpush1.msra.mxu0 0.0
      %584 = vmatprep.subr.mxu0 0.0
      %585 = vmatpush1.msra.mxu0 0.0
      %586 = vmatprep.subr.mxu0 0.0
      %587 = vmatpush1.msra.mxu0 0.0
      %588 = vmatprep.subr.mxu0 0.0
      %589 = vmatpush1.msra.mxu0 0.0
      %590 = vmatprep.subr.mxu0 0.0
      %591 = vmatpush1.msra.mxu0 0.0
      %592 = vmatprep.subr.mxu0 0.0
      %593 = vmatpush1.msra.mxu0 0.0
      %594 = vmatprep.subr.mxu0 0.0
      %595 = vmatpush1.msra.mxu0 0.0
      %596 = vmatprep.subr.mxu0 0.0
      %597 = vmatpush1.msra.mxu0 0.0
      %598 = vmatprep.subr.mxu0 0.0
      %599 = vmatpush1.msra.mxu0 0.0
      %600 = vmatprep.subr.mxu0 0.0
      %601 = vmatpush1.msra.mxu0 0.0
      %602 = vmatprep.subr.mxu0 0.0
      %603 = vmatpush1.msra.mxu0 0.0
      %604 = vmatprep.subr.mxu0 0.0
      %605 = vmatpush1.msra.mxu0 0.0
      %606 = vmatprep.subr.mxu0 0.0
      %607 = vmatpush1.msra.mxu0 0.0
      %608 = vmatprep.subr.mxu0 0.0
      %609 = vmatpush1.msra.mxu0 0.0
      %610 = vmatprep.subr.mxu0 0.0
      %611 = vmatpush1.msra.mxu0 0.0
      %612 = vmatprep.subr.mxu0 0.0
      %613 = vmatpush1.msra.mxu0 %v566
      %614 = vmatprep.subr.mxu0 0.0
      %615 = vmatpush2.msra.mxu0 0.0
      %616 = vmatprep.subr.mxu0 0.0
      %617 = vmatpush2.msra.mxu0 0.0
      %618 = vmatprep.subr.mxu0 0.0
      %619 = vmatpush2.msra.mxu0 0.0
      %620 = vmatprep.subr.mxu0 0.0
      %621 = vmatpush2.msra.mxu0 0.0
      %622 = vmatprep.subr.mxu0 0.0
      %623 = vmatpush2.msra.mxu0 0.0
      %624 = vmatprep.subr.mxu0 0.0
      %625 = vmatpush2.msra.mxu0 0.0
      %626 = vmatprep.subr.mxu0 0.0
      %627 = vmatpush2.msra.mxu0 0.0
      %628 = vmatprep.subr.mxu0 0.0
      %629 = vmatpush2.msra.mxu0 0.0
      %630 = vmatprep.subr.mxu0 0.0
      %631 = vmatpush2.msra.mxu0 0.0
      %632 = vmatprep.subr.mxu0 0.0
      %633 = vmatpush2.msra.mxu0 0.0
      %634 = vmatprep.subr.mxu0 0.0
      %635 = vmatpush2.msra.mxu0 0.0
      %636 = vmatprep.subr.mxu0 0.0
      %637 = vmatpush2.msra.mxu0 0.0
      %638 = vmatprep.subr.mxu0 0.0
      %639 = vmatpush2.msra.mxu0 0.0
      %640 = vmatprep.subr.mxu0 0.0
      %641 = vmatpush2.msra.mxu0 0.0
      %642 = vmatprep.subr.mxu0 0.0
      %643 = vmatpush2.msra.mxu0 0.0
      %644 = vmatprep.subr.mxu0 0.0
      %645 = vmatpush2.msra.mxu0 0.0
      %646 = vmatprep.mubr.f32.mxu0 0.0
      %647 = vmatmul.mubr.f32.gmra.mxu0 %v580
      %v648 = vpop.f32.mrf.mxu0
      %v649 = vadd.f32 %v576, %v648
      %v650 = vpop.f32.mrf.mxu0
      %651 = vdwg.mxu0
      %v652 = vmax.f32 %v649, 0.0
      %v653 = vld [vmem:[%s5 + $0x8] sm:$0xff]
      %v654 = vld [vmem:[%s5 + $0x10] sm:$0xff]
      %v655 = vld [vmem:[%s6] sm:$0xff]
      %v656 = vld [vmem:[%s6 + $0x8] sm:$0xff]
      %658 = vset.pattern.permute.xlu0 1
      %659 = vperm.xlu0 %658, %v655
      %v660 = vpop.permute.xlu0 %659
      %663 = vset.pattern.permute.xlu0 1
      %664 = vperm.xlu0 %663, %v656
      %v665 = vpop.permute.xlu0 %664
      %v668 = vsel %vm578, %v653, 0
      %v671 = vsel %vm578, %v654, 0
      %673 = vmatprep.subr.mxu0 0.0
      %674 = vmatpush1.msra.mxu0 0.0
      %675 = vmatprep.subr.mxu0 0.0
      %676 = vmatpush1.msra.mxu0 0.0
      %677 = vmatprep.subr.mxu0 0.0
      %678 = vmatpush1.msra.mxu0 0.0
      %679 = vmatprep.subr.mxu0 0.0
      %680 = vmatpush1.msra.mxu0 0.0
      %681 = vmatprep.subr.mxu0 0.0
      %682 = vmatpush1.msra.mxu0 0.0
      %683 = vmatprep.subr.mxu0 0.0
      %684 = vmatpush1.msra.mxu0 0.0
      %685 = vmatprep.subr.mxu0 0.0
      %686 = vmatpush1.msra.mxu0 0.0
      %687 = vmatprep.subr.mxu0 0.0
      %688 = vmatpush1.msra.mxu0 0.0
      %689 = vmatprep.subr.mxu0 0.0
      %690 = vmatpush1.msra.mxu0 0.0
      %691 = vmatprep.subr.mxu0 0.0
      %692 = vmatpush1.msra.mxu0 0.0
      %693 = vmatprep.subr.mxu0 0.0
      %694 = vmatpush1.msra.mxu0 0.0
      %695 = vmatprep.subr.mxu0 0.0
      %696 = vmatpush1.msra.mxu0 0.0
      %697 = vmatprep.subr.mxu0 0.0
      %698 = vmatpush1.msra.mxu0 0.0
      %699 = vmatprep.subr.mxu0 0.0
      %700 = vmatpush1.msra.mxu0 0.0
      %701 = vmatprep.subr.mxu0 0.0
      %702 = vmatpush1.msra.mxu0 0.0
      %703 = vmatprep.subr.mxu0 0.0
      %704 = vmatpush1.msra.mxu0 %v652
      %705 = vmatprep.subr.mxu0 0.0
      %706 = vmatpush2.msra.mxu0 0.0
      %707 = vmatprep.subr.mxu0 0.0
      %708 = vmatpush2.msra.mxu0 0.0
      %709 = vmatprep.subr.mxu0 0.0
      %710 = vmatpush2.msra.mxu0 0.0
      %711 = vmatprep.subr.mxu0 0.0
      %712 = vmatpush2.msra.mxu0 0.0
      %713 = vmatprep.subr.mxu0 0.0
      %714 = vmatpush2.msra.mxu0 0.0
      %715 = vmatprep.subr.mxu0 0.0
      %716 = vmatpush2.msra.mxu0 0.0
      %717 = vmatprep.subr.mxu0 0.0
      %718 = vmatpush2.msra.mxu0 0.0
      %719 = vmatprep.subr.mxu0 0.0
      %720 = vmatpush2.msra.mxu0 0.0
      %721 = vmatprep.subr.mxu0 0.0
      %722 = vmatpush2.msra.mxu0 0.0
      %723 = vmatprep.subr.mxu0 0.0
      %724 = vmatpush2.msra.mxu0 0.0
      %725 = vmatprep.subr.mxu0 0.0
      %726 = vmatpush2.msra.mxu0 0.0
      %727 = vmatprep.subr.mxu0 0.0
      %728 = vmatpush2.msra.mxu0 0.0
      %729 = vmatprep.subr.mxu0 0.0
      %730 = vmatpush2.msra.mxu0 0.0
      %731 = vmatprep.subr.mxu0 0.0
      %732 = vmatpush2.msra.mxu0 0.0
      %733 = vmatprep.subr.mxu0 0.0
      %734 = vmatpush2.msra.mxu0 0.0
      %735 = vmatprep.subr.mxu0 0.0
      %736 = vmatpush2.msra.mxu0 0.0
      %737 = vmatprep.mubr.f32.mxu0 0.0
      %738 = vmatmul.mubr.f32.gmra.mxu0 %v668
      %v739 = vpop.f32.mrf.mxu0
      %v740 = vadd.f32 %v660, %v739
      %v741 = vpop.f32.mrf.mxu0
      %742 = vmatprep.mubr.f32.mxu0 0.0
      %743 = vmatmul.mubr.f32.gmra.mxu0 %v671
      %v744 = vpop.f32.mrf.mxu0
      %v745 = vadd.f32 %v665, %v744
      %v746 = vpop.f32.mrf.mxu0
      %747 = vdwg.mxu0
      %v748 = vld [vmem:[%s330] sm:$0x1]
      %749 = vset.pattern.permute.xlu0 2
      %750 = vperm.xlu0 %749, %v655
      %v751 = vpop.permute.xlu0 %750
      %753 = vset.pattern.permute.xlu0 2
      %754 = vperm.xlu0 %753, %v656
      %v755 = vpop.permute.xlu0 %754
      %v758 = vlaneseq
      %v759 = vshrl.u32 %v758, 7
      %v760 = vsub.s32 0, %v759
      %v761 = vrot.slane %v748, %v760
      %v763 = vmul.f32 %v751, %v761
      %v764 = vmul.f32 %v755, %v761
      %v765 = vadd.f32 %v740, %v763
      %v766 = vadd.f32 %v745, %v764
      %v767 = vxor.u32 %v765, 2147483648
      %v768 = vmul.f32 %v767, 1.442695
      %v769 = vpow.pop %v768
      %v770 = vadd.f32 %v769, 1.0
      %v771 = vrcp.pop %v770
      %v772 = vmul.f32 1.0, %v771
      %v773 = vtanh.pop %v766
      %v774 = vmul.f32 %v772, %v773
      %v775 = vld [vmem:[%s5 + $0x18] sm:$0xff]
      %v776 = vld [vmem:[%s5 + $0x20] sm:$0xff]
      %777 = vset.pattern.permute.xlu0 3
      %778 = vperm.xlu0 %777, %v655
      %v779 = vpop.permute.xlu0 %778
      %781 = vset.pattern.permute.xlu0 3
      %782 = vperm.xlu0 %781, %v656
      %v783 = vpop.permute.xlu0 %782
      %v786 = vsel %vm578, %v775, 0
      %v789 = vsel %vm578, %v776, 0
      %791 = vmatprep.subr.mxu0 0.0
      %792 = vmatpush1.msra.mxu0 0.0
      %793 = vmatprep.subr.mxu0 0.0
      %794 = vmatpush1.msra.mxu0 0.0
      %795 = vmatprep.subr.mxu0 0.0
      %796 = vmatpush1.msra.mxu0 0.0
      %797 = vmatprep.subr.mxu0 0.0
      %798 = vmatpush1.msra.mxu0 0.0
      %799 = vmatprep.subr.mxu0 0.0
      %800 = vmatpush1.msra.mxu0 0.0
      %801 = vmatprep.subr.mxu0 0.0
      %802 = vmatpush1.msra.mxu0 0.0
      %803 = vmatprep.subr.mxu0 0.0
      %804 = vmatpush1.msra.mxu0 0.0
      %805 = vmatprep.subr.mxu0 0.0
      %806 = vmatpush1.msra.mxu0 0.0
      %807 = vmatprep.subr.mxu0 0.0
      %808 = vmatpush1.msra.mxu0 0.0
      %809 = vmatprep.subr.mxu0 0.0
      %810 = vmatpush1.msra.mxu0 0.0
      %811 = vmatprep.subr.mxu0 0.0
      %812 = vmatpush1.msra.mxu0 0.0
      %813 = vmatprep.subr.mxu0 0.0
      %814 = vmatpush1.msra.mxu0 0.0
      %815 = vmatprep.subr.mxu0 0.0
      %816 = vmatpush1.msra.mxu0 0.0
      %817 = vmatprep.subr.mxu0 0.0
      %818 = vmatpush1.msra.mxu0 0.0
      %819 = vmatprep.subr.mxu0 0.0
      %820 = vmatpush1.msra.mxu0 0.0
      %821 = vmatprep.subr.mxu0 0.0
      %822 = vmatpush1.msra.mxu0 %v774
      %823 = vmatprep.subr.mxu0 0.0
      %824 = vmatpush2.msra.mxu0 0.0
      %825 = vmatprep.subr.mxu0 0.0
      %826 = vmatpush2.msra.mxu0 0.0
      %827 = vmatprep.subr.mxu0 0.0
      %828 = vmatpush2.msra.mxu0 0.0
      %829 = vmatprep.subr.mxu0 0.0
      %830 = vmatpush2.msra.mxu0 0.0
      %831 = vmatprep.subr.mxu0 0.0
      %832 = vmatpush2.msra.mxu0 0.0
      %833 = vmatprep.subr.mxu0 0.0
      %834 = vmatpush2.msra.mxu0 0.0
      %835 = vmatprep.subr.mxu0 0.0
      %836 = vmatpush2.msra.mxu0 0.0
      %837 = vmatprep.subr.mxu0 0.0
      %838 = vmatpush2.msra.mxu0 0.0
      %839 = vmatprep.subr.mxu0 0.0
      %840 = vmatpush2.msra.mxu0 0.0
      %841 = vmatprep.subr.mxu0 0.0
      %842 = vmatpush2.msra.mxu0 0.0
      %843 = vmatprep.subr.mxu0 0.0
      %844 = vmatpush2.msra.mxu0 0.0
      %845 = vmatprep.subr.mxu0 0.0
      %846 = vmatpush2.msra.mxu0 0.0
      %847 = vmatprep.subr.mxu0 0.0
      %848 = vmatpush2.msra.mxu0 0.0
      %849 = vmatprep.subr.mxu0 0.0
      %850 = vmatpush2.msra.mxu0 0.0
      %851 = vmatprep.subr.mxu0 0.0
      %852 = vmatpush2.msra.mxu0 0.0
      %853 = vmatprep.subr.mxu0 0.0
      %854 = vmatpush2.msra.mxu0 0.0
      %855 = vmatprep.mubr.f32.mxu0 0.0
      %856 = vmatmul.mubr.f32.gmra.mxu0 %v786
      %v857 = vpop.f32.mrf.mxu0
      %v858 = vadd.f32 %v779, %v857
      %v859 = vpop.f32.mrf.mxu0
      %860 = vmatprep.mubr.f32.mxu0 0.0
      %861 = vmatmul.mubr.f32.gmra.mxu0 %v789
      %v862 = vpop.f32.mrf.mxu0
      %v863 = vadd.f32 %v783, %v862
      %v864 = vpop.f32.mrf.mxu0
      %865 = vdwg.mxu0
      %v866 = vadd.f32 %v344, %v858
      %v867 = vmul.f32 %v866, 0.70710677
      %868 = vst [vmem:[%s338] sm:$0xff] %v867
      %869 = vst [vmem:[%s342] sm:$0xff] %v863
      %p870 = scmp.lt.s32.totalorder %s20, 1
      %s871 = scalar_select %p870, %s20, 1
      %s872 = smul.addr %s871, 8
      %s873 = scalar_lea.vmem %s7, %s872
      %p874 = scmp.lt.s32.totalorder %s20, 1
      %s875 = scalar_select %p874, %s20, 1
      %s876 = smul.addr %s875, 8
      %s877 = scalar_lea.vmem %s8, %s876
      // Predicated region
      $region49: #{gcn_residual_block.1} parent=47 // pred_check
        %p878 = pneg %p200
      $region50: #{gcn_residual_block.1} parent=47 // pred_check_branch
        %880 = sbr.rel (%p878) target = $region52
      $region51: #{gcn_residual_block.1} parent=47 // pred_region
        _
      $region52: #{gcn_residual_block.1} parent=47 // pred_fallthru
        _
      // Predicated region
      $region53: #{gcn_residual_block.1} parent=47 // pred_check
        %p881 = pneg %p226
      $region54: #{gcn_residual_block.1} parent=47 // pred_check_branch
        %883 = sbr.rel (%p881) target = $region56
      $region55: #{gcn_residual_block.1} parent=47 // pred_region
        _
      $region56: #{gcn_residual_block.1} parent=47 // pred_fallthru
        _
    $region48: #{gcn_residual_block.1} parent=5 // pred_fallthru
      _
    %p884 = scmp.le.s32.totalorder 2, %s15
    // Predicated region
    $region57: #{gcn_residual_block.1} parent=5 // pred_check
      %p885 = pneg %p884
    $region58: #{gcn_residual_block.1} parent=5 // pred_check_branch
      %887 = sbr.rel (%p885) target = $region60
    $region59: #{gcn_residual_block.1} parent=5 // pred_region
      %s888 = ssub.s32 %s15, 2
      // Predicated region
      $region61: #{gcn_residual_block.1} parent=59 // pred_check
        %p889 = pneg %p206
      $region62: #{gcn_residual_block.1} parent=59 // pred_check_branch
        %891 = sbr.rel (%p889) target = $region64
      $region63: #{gcn_residual_block.1} parent=59 // pred_region
        %p892 = scmp.lt.s32.totalorder %s21, 1
        %s893 = scalar_select %p892, %s21, 1
        %s894 = smul.addr %s893, 8
        %s895 = scalar_lea.vmem %s7, %s894
      $region64: #{gcn_residual_block.1} parent=59 // pred_fallthru
        _
      // Predicated region
      $region65: #{gcn_residual_block.1} parent=59 // pred_check
        %p896 = pneg %p232
      $region66: #{gcn_residual_block.1} parent=59 // pred_check_branch
        %898 = sbr.rel (%p896) target = $region68
      $region67: #{gcn_residual_block.1} parent=59 // pred_region
        %p899 = scmp.lt.s32.totalorder %s21, 1
        %s900 = scalar_select %p899, %s21, 1
        %s901 = smul.addr %s900, 8
        %s902 = scalar_lea.vmem %s8, %s901
      $region68: #{gcn_residual_block.1} parent=59 // pred_fallthru
        _
    $region60: #{gcn_residual_block.1} parent=5 // pred_fallthru
      _
  $region6: #{gcn_residual_block.1} parent=0 // loop_footer
    %s19 = sadd.s32 1, %s15
  $region7: #{gcn_residual_block.1} parent=0 // loop_footer_branch
    %14 = sbr.rel target = $region3
  $region8: #{gcn_residual_block.1} parent=0 // loop_exit
    _

</llo_original>
